<compile_context>
chip_gen: v6e
topology: v6e:2x2x1
jax: 0.10.0
libtpu: 0.0.40
codegen_flags: <defaults>
</compile_context>

<pallas_src>
import jax
import jax.numpy as jnp
from jax.experimental import pallas as pl
from jax.experimental.pallas import tpu as pltpu

FEATS = 21
OUT = 2
KAPPA = 64                   # samples packed per row -> 128-lane-dense output
PACKED_IN = FEATS * KAPPA    # 1344
PACKED_OUT = OUT * KAPPA     # 128


def _round_up(n: int, m: int) -> int:
    return ((n + m - 1) // m) * m


def net_emb_packed_kernel(x_ref, w_ref, b_ref, o_ref):
    # One MXU pass per batch tile: (tile, 1344) @ (1344, 128) + (1, 128).
    o_ref[...] = (
        jnp.dot(x_ref[...], w_ref[...], preferred_element_type=jnp.float32)
        + b_ref[...]
    ).astype(o_ref.dtype)


def _fuse_params(params):
    """Collapse the 4 affine layers into a single (21,2) affine map."""
    (w1, b1), (w2, b2), (w3, b3), (w4, b4) = params
    w_f = w1 @ w2 @ w3 @ w4                               # (21, 2)
    b_f = ((b1 @ w2 + b2) @ w3 + b3) @ w4 + b4            # (1, 2)
    return w_f, b_f


def net_emb_forward(x, params, tile_rows: int = 1024):
    """Forward pass of Net_emb.

    x: (B, 21) float32.  params: list of 4 (W, b) pairs, W stored as
    (in_features, out_features), b as (1, out_features).
    """
    w_f, b_f = _fuse_params(params)

    B = x.shape[0]
    B_main = (B // KAPPA) * KAPPA        # bulk handled by the packed kernel
    R = B_main // KAPPA                  # packed rows

    pieces = []

    if R > 0:
        # Free row-major reshape: 64 consecutive samples per packed row.
        x_main = x if B_main == B else x[:B_main]
        x_packed = x_main.reshape(R, PACKED_IN)

        # Block-diagonal fused weight (one-time, tiny wrapper cost) and tiled bias.
        w_big = jnp.kron(jnp.eye(KAPPA, dtype=w_f.dtype), w_f)   # (1344, 128)
        b_big = jnp.tile(b_f, (1, KAPPA))                        # (1, 128)

        # Tile sizing in packed rows: big tiles to amortize per-step overhead,
        # but at least 2 grid steps (when R allows) so v7x megacore engages.
        if R <= tile_rows:
            if R >= 16:
                tile_rows = _round_up(pl.cdiv(R, 2), 8)   # 2 steps, last may be ragged
            else:
                tile_rows = R                             # single full-extent block
        else:
            tile_rows = _round_up(tile_rows, 8)
        grid = (pl.cdiv(R, tile_rows),)

        # Computed VMEM budget (double-buffered x/out + resident weights),
        # with headroom, capped at 32 MiB (safe on v5e/v6e/v7x).
        vmem_need = (2 * tile_rows * PACKED_IN * 4
                     + 2 * tile_rows * PACKED_OUT * 4
                     + 2 * PACKED_IN * PACKED_OUT * 4
                     + 2 * PACKED_OUT * 4)
        vmem_limit = int(min(2 * vmem_need + (4 << 20), 32 * 1024 * 1024))

        cost = pl.CostEstimate(
            flops=2 * R * PACKED_IN * PACKED_OUT,
            transcendentals=0,
            bytes_accessed=(R * PACKED_IN + R * PACKED_OUT
                            + PACKED_IN * PACKED_OUT + PACKED_OUT) * 4,
        )

        out_packed = pl.pallas_call(
            net_emb_packed_kernel,
            out_shape=jax.ShapeDtypeStruct((R, PACKED_OUT), jnp.float32),
            grid=grid,
            in_specs=[
                # Streamed, double-buffered packed batch tiles of x.
                pl.BlockSpec((tile_rows, PACKED_IN), lambda i: (i, 0)),
                # Fused block-diagonal weight / bias: DMA'd once, VMEM-resident.
                pl.BlockSpec((PACKED_IN, PACKED_OUT), lambda i: (0, 0)),
                pl.BlockSpec((1, PACKED_OUT), lambda i: (0, 0)),
            ],
            out_specs=pl.BlockSpec((tile_rows, PACKED_OUT), lambda i: (i, 0)),
            compiler_params=pltpu.CompilerParams(
                dimension_semantics=("parallel",),   # megacore sharding on v7x
                vmem_limit_bytes=vmem_limit,
            ),
            cost_estimate=cost,
        )(x_packed, w_big, b_big)

        pieces.append(out_packed.reshape(B_main, OUT))

    if B_main < B:
        # Tiny (< 64 row) remainder: not worth a kernel launch, and avoids any
        # whole-array pad/copy of x.
        tail = x[B_main:]
        pieces.append(tail @ w_f + b_f)

    return pieces[0] if len(pieces) == 1 else jnp.concatenate(pieces, axis=0)


def init_params(key):
    """Deterministic init mirroring PyTorch nn.Linear default
    (U[-1/sqrt(fan_in), 1/sqrt(fan_in)]).  Weights stored as (in, out)."""
    dims = [(21, 32), (32, 64), (64, 32), (32, 2)]
    params = []
    for fan_in, fan_out in dims:
        key, kw, kb = jax.random.split(key, 3)
        bound = 1.0 / jnp.sqrt(float(fan_in))
        w = jax.random.uniform(kw, (fan_in, fan_out), jnp.float32, -bound, bound)
        b = jax.random.uniform(kb, (1, fan_out), jnp.float32, -bound, bound)
        params.append((w, b))
    return params


def reference_forward(x, params):
    # Un-fused 4-layer chain, exactly mirroring the PyTorch forward.
    h = x
    for w, b in params:
        h = h @ w + b
    return h


if __name__ == "__main__":
    key = jax.random.PRNGKey(0)
    key, kx1, kx2, kx3 = jax.random.split(key, 4)
    params = init_params(key)

    # 1) Packed kernel path with 2 grid steps and a ragged last block
    #    (B = 41*64 -> R = 41 packed rows, tile = 24).
    B1 = 41 * KAPPA
    x1 = jax.random.normal(kx1, (B1, FEATS), dtype=jnp.float32)
    out1 = jax.block_until_ready(net_emb_forward(x1, params))
    ref1 = reference_forward(x1, params)
    assert out1.shape == (B1, OUT), out1.shape
    assert jnp.allclose(out1, ref1, atol=1e-4, rtol=1e-4), (
        f"mismatch: max abs err {jnp.max(jnp.abs(out1 - ref1))}")

    # 2) Batch not divisible by 64: kernel bulk (256 rows) + tiny JAX tail (44 rows).
    B2 = 300
    x2 = jax.random.normal(kx2, (B2, FEATS), dtype=jnp.float32)
    out2 = jax.block_until_ready(net_emb_forward(x2, params))
    ref2 = reference_forward(x2, params)
    assert out2.shape == (B2, OUT), out2.shape
    assert jnp.allclose(out2, ref2, atol=1e-4, rtol=1e-4), (
        f"mismatch: max abs err {jnp.max(jnp.abs(out2 - ref2))}")

    # 3) Tiny batch (< 64): remainder-only path.
    B3 = 8
    x3 = jax.random.normal(kx3, (B3, FEATS), dtype=jnp.float32)
    out3 = jax.block_until_ready(net_emb_forward(x3, params))
    ref3 = reference_forward(x3, params)
    assert out3.shape == (B3, OUT), out3.shape
    assert jnp.allclose(out3, ref3, atol=1e-4, rtol=1e-4), (
        f"mismatch: max abs err {jnp.max(jnp.abs(out3 - ref3))}")

    print("KERNEL_OK")
</pallas_src>

<mosaic_0001>
module attributes {stable_mosaic.version = 11 : i64} {
  func.func @net_emb_packed_kernel(%arg0: i32, %arg1: memref<24x1344xf32, #tpu.memory_space<vmem>>, %arg2: memref<1344x128xf32, #tpu.memory_space<vmem>>, %arg3: memref<1x128xf32, #tpu.memory_space<vmem>>, %arg4: memref<24x128xf32, #tpu.memory_space<vmem>>) attributes {dimension_semantics = [#tpu.dimension_semantics<parallel>], iteration_bounds = array<i64: 2>, scalar_prefetch = 0 : i64, scratch_operands = 0 : i64, tpu.core_type = #tpu.core_type<tc>, window_params = [{transform_indices = @transform_0, window_bounds = array<i64: 24, 1344>}, {pipeline_mode = #tpu.pipeline_mode<synchronous>, transform_indices = @transform_1, window_bounds = array<i64: 1344, 128>}, {pipeline_mode = #tpu.pipeline_mode<synchronous>, transform_indices = @transform_2, window_bounds = array<i64: 1, 128>}, {transform_indices = @transform_3, window_bounds = array<i64: 24, 128>}]} {
    %c0 = arith.constant 0 : index
    %c0_0 = arith.constant 0 : index
    %0 = vector.load %arg1[%c0, %c0_0] : memref<24x1344xf32, #tpu.memory_space<vmem>>, vector<24x1344xf32>
    %c0_1 = arith.constant 0 : index
    %c0_2 = arith.constant 0 : index
    %1 = vector.load %arg2[%c0_1, %c0_2] : memref<1344x128xf32, #tpu.memory_space<vmem>>, vector<1344x128xf32>
    %cst = arith.constant dense<0.000000e+00> : vector<24x128xf32>
    %2 = tpu.matmul %0, %1, %cst {dimension_numbers = #tpu.dot_dimension_numbers<[1], [0], [0], [1], [0, 0, 1, 1], [], []>} : vector<24x1344xf32>, vector<1344x128xf32>, vector<24x128xf32> -> vector<24x128xf32>
    %c0_3 = arith.constant 0 : index
    %c0_4 = arith.constant 0 : index
    %3 = vector.load %arg3[%c0_3, %c0_4] : memref<1x128xf32, #tpu.memory_space<vmem>>, vector<1x128xf32>
    %4 = vector.broadcast %3 : vector<1x128xf32> to vector<24x128xf32>
    %5 = arith.addf %2, %4 : vector<24x128xf32>
    %c0_5 = arith.constant 0 : index
    %c0_6 = arith.constant 0 : index
    %6 = vector.load %arg4[%c0_5, %c0_6] : memref<24x128xf32, #tpu.memory_space<vmem>>, vector<24x128xf32>
    tpu.vector_store %arg4[%c0_5, %c0_6], %5 {strides = array<i32>} : memref<24x128xf32, #tpu.memory_space<vmem>>, vector<24x128xf32>,
    return
  }
  func.func @transform_0(%arg0: i32) -> (i32, i32) {
    %c0_i32 = arith.constant 0 : i32
    %c0_i32_0 = arith.constant 0 : i32
    return %arg0, %c0_i32 : i32, i32
  }
  func.func @transform_1(%arg0: i32) -> (i32, i32) {
    %c0_i32 = arith.constant 0 : i32
    %c0_i32_0 = arith.constant 0 : i32
    %c0_i32_1 = arith.constant 0 : i32
    return %c0_i32, %c0_i32_0 : i32, i32
  }
  func.func @transform_2(%arg0: i32) -> (i32, i32) {
    %c0_i32 = arith.constant 0 : i32
    %c0_i32_0 = arith.constant 0 : i32
    %c0_i32_1 = arith.constant 0 : i32
    return %c0_i32, %c0_i32_0 : i32, i32
  }
  func.func @transform_3(%arg0: i32) -> (i32, i32) {
    %c0_i32 = arith.constant 0 : i32
    %c0_i32_0 = arith.constant 0 : i32
    return %arg0, %c0_i32 : i32, i32
  }
}

</mosaic_0001>

<llo_original>
// kernel: tpu_custom_call.1
$region0: #{tpu_custom_call.1}
  #allocation0 [shape = 'u32[]', space=smem, size = 0x4, offset = 0x4, fixed_abs, tag = 'smem constant byte address 0x4 - core index']
  #allocation1 [shape = 'u32[144,128]{1,0:T(1,128)}', space=vmem, size = 0x12000, scoped, tag = 'internal scratch']
  %s0 = inlined_call_operand.hbm [shape: f32[41,1344], index: 0, kind: input, shape index: {}]
  %s1 = inlined_call_operand.hbm [shape: f32[1344,128], index: 1, kind: input, shape index: {}]
  %s2 = inlined_call_operand.vmem [shape: f32[1,128], index: 2, kind: input, shape index: {}]
  %s3 = inlined_call_operand.hbm [shape: f32[41,128], index: 3, kind: output, shape index: {}]
  %s4 = sld [smem:[#allocation0]]
  $region53: #{tpu_custom_call.1} parent=0
    _
  %s6 = ssub.s32 1, %s4
  %s7 = scalar_select 0, %s6, %s4
  $region1: #{tpu_custom_call.1} parent=0
    #allocation2 [shape = 'u8[270336]{0}', space=vmem, size = 0x42000, scoped, tag = 'input window, operand 0']
    #allocation3 [shape = 's32[2]{0}', space=sflag, size = 0x8, scoped, tag = 'scoped memory for tpu_custom_call.1']
    #allocation4 [shape = 's32[2]{0}', space=sflag, size = 0x8, scoped, tag = 'scoped memory for tpu_custom_call.1']
    #allocation5 [shape = 'u8[688128]{0}', space=vmem, size = 0xa8000, scoped, tag = 'input window, operand 1, single buffered']
    #allocation6 [shape = 's32[1]{0}', space=sflag, size = 0x4, scoped, tag = 'scoped memory for tpu_custom_call.1']
    #allocation7 [shape = 'u8[24576]{0}', space=vmem, size = 0x6000, scoped, tag = 'output window, operand 0']
    %8 = vsyncpa [#allocation3], 0
    %s9 = scalar_lea.sflag [#allocation3], 1
    %10 = vsyncpa %s9, 0
    %11 = vsyncpa [#allocation6], 0
    %12 = vsyncpa [#allocation4], 0
    %s13 = scalar_lea.sflag [#allocation4], 1
    %14 = vsyncpa %s13, 0
    loop: start=0, step=1, limit=4
    $region2: #{tpu_custom_call.1} parent=1 // loop_pre_header
      _
    $region3: #{tpu_custom_call.1} parent=1 // loop_header
      %s16 = sphi 0, %s20
      %p17 = scmp.ge.s32.totalorder %s16, 4
      %s26 = sphi 0, %s28
      %s29 = sphi 0, %s26
      %s30 = sphi 0, %s29
      %s46 = sphi 0, %s30
      %s50 = sphi 0, %s50
      %s52 = sphi 0, %s50
      %s53 = sphi 0, %s52
      %s67 = sphi 0, %s53
      %s71 = sphi 0, %s71
      %s73 = sphi 0, %s71
      %s74 = sphi 0, %s73
      %s88 = sphi 0, %s74
      %s94 = sphi 0, %s96
      %s97 = sphi 0, %s94
      %s98 = sphi 0, %s97
      %s114 = sphi 0, %s98
    $region4: #{tpu_custom_call.1} parent=1 // loop_header_branch
      %19 = sbr.rel (%p17) target = $region8
    $region5: #{tpu_custom_call.1} parent=1 // loop_body
      %s21 = ssub.s32 %s16, 1
      %s22 = ssub.s32 %s16, 2
      %s23 = sadd.s32 %s16, 1
      %s24 = ssub.s32 %s16, %s23
      %p25 = scmp.eq.s32.totalorder %s24, 0
      %s27 = sadd.s32 %s26, 1
      %s28 = scalar_select %p25, %s26, %s27
      %p31 = pneg %p25
      %p32 = scmp.eq.s32.totalorder %s16, 1
      %p33 = por %p31, %p32
      %p34 = scmp.ne.s32.totalorder %s26, %s29
      %p35 = scmp.eq.s32.totalorder %s16, 0
      %p36 = por %p34, %p35
      %p37 = scmp.ne.s32.totalorder %s26, %s29
      %p38 = scmp.eq.s32.totalorder %s21, 1
      %p39 = por %p37, %p38
      %p40 = scmp.ne.s32.totalorder %s29, %s30
      %p41 = scmp.eq.s32.totalorder %s21, 0
      %p42 = por %p40, %p41
      %p43 = scmp.ne.s32.totalorder %s29, %s30
      %p44 = scmp.eq.s32.totalorder %s22, 1
      %p45 = por %p43, %p44
      %p47 = scmp.ne.s32.totalorder %s30, %s46
      %p48 = scmp.eq.s32.totalorder %s22, 0
      %p49 = por %p47, %p48
      %s51 = sadd.s32 %s50, 1
      %p54 = scmp.eq.s32.totalorder %s16, 1
      %p55 = scmp.ne.s32.totalorder %s50, %s52
      %p56 = scmp.eq.s32.totalorder %s16, 0
      %p57 = por %p55, %p56
      %p58 = scmp.ne.s32.totalorder %s50, %s52
      %p59 = scmp.eq.s32.totalorder %s21, 1
      %p60 = por %p58, %p59
      %p61 = scmp.ne.s32.totalorder %s52, %s53
      %p62 = scmp.eq.s32.totalorder %s21, 0
      %p63 = por %p61, %p62
      %p64 = scmp.ne.s32.totalorder %s52, %s53
      %p65 = scmp.eq.s32.totalorder %s22, 1
      %p66 = por %p64, %p65
      %p68 = scmp.ne.s32.totalorder %s53, %s67
      %p69 = scmp.eq.s32.totalorder %s22, 0
      %p70 = por %p68, %p69
      %s72 = sadd.s32 %s71, 1
      %p75 = scmp.eq.s32.totalorder %s16, 1
      %p76 = scmp.ne.s32.totalorder %s71, %s73
      %p77 = scmp.eq.s32.totalorder %s16, 0
      %p78 = por %p76, %p77
      %p79 = scmp.ne.s32.totalorder %s71, %s73
      %p80 = scmp.eq.s32.totalorder %s21, 1
      %p81 = por %p79, %p80
      %p82 = scmp.ne.s32.totalorder %s73, %s74
      %p83 = scmp.eq.s32.totalorder %s21, 0
      %p84 = por %p82, %p83
      %p85 = scmp.ne.s32.totalorder %s73, %s74
      %p86 = scmp.eq.s32.totalorder %s22, 1
      %p87 = por %p85, %p86
      %p89 = scmp.ne.s32.totalorder %s74, %s88
      %p90 = scmp.eq.s32.totalorder %s22, 0
      %p91 = por %p89, %p90
      %s92 = ssub.s32 %s16, %s23
      %p93 = scmp.eq.s32.totalorder %s92, 0
      %s95 = sadd.s32 %s94, 1
      %s96 = scalar_select %p93, %s94, %s95
      %p99 = pneg %p93
      %p100 = scmp.eq.s32.totalorder %s16, 1
      %p101 = por %p99, %p100
      %p102 = scmp.ne.s32.totalorder %s94, %s97
      %p103 = scmp.eq.s32.totalorder %s16, 0
      %p104 = por %p102, %p103
      %p105 = scmp.ne.s32.totalorder %s94, %s97
      %p106 = scmp.eq.s32.totalorder %s21, 1
      %p107 = por %p105, %p106
      %p108 = scmp.ne.s32.totalorder %s97, %s98
      %p109 = scmp.eq.s32.totalorder %s21, 0
      %p110 = por %p108, %p109
      %p111 = scmp.ne.s32.totalorder %s97, %s98
      %p112 = scmp.eq.s32.totalorder %s22, 1
      %p113 = por %p111, %p112
      %p115 = scmp.ne.s32.totalorder %s98, %s114
      %p116 = scmp.eq.s32.totalorder %s22, 0
      %p117 = por %p115, %p116
      %p118 = scmp.le.s32.totalorder 1, %s16
      %p119 = scmp.lt.s32.totalorder %s16, 3
      %p120 = pnand %p118, %p119
      %p121 = pneg %p120
      // Predicated region
      $region9: #{tpu_custom_call.1} parent=5 // pred_check
        _
      $region10: #{tpu_custom_call.1} parent=5 // pred_check_branch
        %123 = sbr.rel (%p120) target = $region12
      $region11: #{tpu_custom_call.1} parent=5 // pred_region
        %s124 = ssub.s32 %s16, 1
        // Predicated region
        $region13: #{tpu_custom_call.1} parent=11 // pred_check
          %p125 = pneg %p63
        $region14: #{tpu_custom_call.1} parent=11 // pred_check_branch
          %127 = sbr.rel (%p125) target = $region16
        $region15: #{tpu_custom_call.1} parent=11 // pred_region
          %s129 = ssub.s32 21504, 21504
          %130 = vsyncadd [#allocation6], %s129
          %s131 = sshll.u32 [#allocation5], 4
          %s132 = int_to_ptr.vmem [resolvable:$true] %s131
          %137 = dma.hbm_to_vmem [thread:$0]  %s1, 21504, %s132, [#allocation6], 128, 128, 8
        $region16: #{tpu_custom_call.1} parent=11 // pred_fallthru
          _
        // Predicated region
        $region17: #{tpu_custom_call.1} parent=11 // pred_check
          %p138 = pneg %p84
        $region18: #{tpu_custom_call.1} parent=11 // pred_check_branch
          %140 = sbr.rel (%p138) target = $region20
        $region19: #{tpu_custom_call.1} parent=11 // pred_region
          _
        $region20: #{tpu_custom_call.1} parent=11 // pred_fallthru
          _
      $region12: #{tpu_custom_call.1} parent=5 // pred_fallthru
        _
      %p141 = scmp.lt.s32.totalorder %s16, 2
      // Predicated region
      $region21: #{tpu_custom_call.1} parent=5 // pred_check
        %p142 = pneg %p141
      $region22: #{tpu_custom_call.1} parent=5 // pred_check_branch
        %144 = sbr.rel (%p142) target = $region24
      $region23: #{tpu_custom_call.1} parent=5 // pred_region
        // Predicated region
        $region25: #{tpu_custom_call.1} parent=23 // pred_check
          %p145 = pneg %p36
        $region26: #{tpu_custom_call.1} parent=23 // pred_check_branch
          %147 = sbr.rel (%p145) target = $region28
        $region27: #{tpu_custom_call.1} parent=23 // pred_region
          %s148 = sand.u32 %s26, 1
          %s149 = scalar_lea.sflag [#allocation3], %s148
          %s150 = sand.u32 %s26, 1
          %s151 = smul.addr %s150, 264
          %s152 = scalar_lea.vmem [#allocation2], %s151
          %s153 = smul.u32 3, %s16
          %s155 = ssub.s32 4224, 4224
          %156 = vsyncadd %s149, %s155
          %s157 = smul.addr %s153, 11
          %s158 = smul.addr %s157, 128
          %s159 = scalar_lea.hbm %s0, %s158
          %s160 = sshll.u32 %s152, 4
          %s161 = int_to_ptr.vmem [resolvable:$true] %s160
          %166 = dma.hbm_to_vmem [thread:$0]  %s159, 4224, %s161, %s149, 1408, 1408, 88
        $region28: #{tpu_custom_call.1} parent=23 // pred_fallthru
          _
      $region24: #{tpu_custom_call.1} parent=5 // pred_fallthru
        _
      %p167 = scmp.le.s32.totalorder 1, %s16
      %p168 = scmp.lt.s32.totalorder %s16, 3
      %p169 = pnand %p167, %p168
      %p170 = pneg %p169
      // Predicated region
      $region29: #{tpu_custom_call.1} parent=5 // pred_check
        _
      $region30: #{tpu_custom_call.1} parent=5 // pred_check_branch
        %172 = sbr.rel (%p169) target = $region32
      $region31: #{tpu_custom_call.1} parent=5 // pred_region
        %s173 = ssub.s32 %s16, 1
        %s174 = sand.u32 %s29, 1
        %s175 = scalar_lea.sflag [#allocation3], %s174
        %s176 = sand.u32 %s29, 1
        %s177 = smul.addr %s176, 264
        %s178 = scalar_lea.vmem [#allocation2], %s177
        // Predicated region
        $region33: #{tpu_custom_call.1} parent=31 // pred_check
          %p179 = pneg %p42
        $region34: #{tpu_custom_call.1} parent=31 // pred_check_branch
          %181 = sbr.rel (%p179) target = $region36
        $region35: #{tpu_custom_call.1} parent=31 // pred_region
          %182 = dma.done %s175, 4224
        $region36: #{tpu_custom_call.1} parent=31 // pred_fallthru
          _
        // Predicated region
        $region37: #{tpu_custom_call.1} parent=31 // pred_check
          %p183 = pneg %p63
        $region38: #{tpu_custom_call.1} parent=31 // pred_check_branch
          %185 = sbr.rel (%p183) target = $region40
        $region39: #{tpu_custom_call.1} parent=31 // pred_region
          %186 = dma.done [#allocation6], 21504
        $region40: #{tpu_custom_call.1} parent=31 // pred_fallthru
          _
        %s187 = sand.u32 %s29, 1
        %s188 = scalar_lea.sflag [#allocation3], %s187
        %s189 = sand.u32 %s29, 1
        %s190 = smul.addr %s189, 264
        %s191 = scalar_lea.vmem [#allocation2], %s190
        %p192 = pneg %p42
        %p193 = pneg %p39
        %p194 = pneg %p63
        %p195 = pneg %p60
        %p196 = pneg %p84
        %p197 = pneg %p81
        %p198 = pneg %p110
        %p199 = pneg %p107
        %s200 = sand.u32 %s97, 1
        %s201 = scalar_lea.sflag [#allocation4], %s200
        %s202 = sand.u32 %s97, 1
        %s203 = smul.addr %s202, 24
        %s204 = scalar_lea.vmem [#allocation7], %s203
        %s205 = smul.u32 3, %s21
        %s206 = smul.u32 3, %s21
        %v207 = vld [vmem:[%s178] sm:$0xff]
        %v208 = vld [vmem:[%s178 + $0x8] sm:$0xff]
        %v209 = vld [vmem:[%s178 + $0x10] sm:$0xff]
        %v210 = vld [vmem:[%s178 + $0x18] sm:$0xff]
        %v211 = vld [vmem:[%s178 + $0x20] sm:$0xff]
        %v212 = vld [vmem:[%s178 + $0x28] sm:$0xff]
        %v213 = vld [vmem:[%s178 + $0x30] sm:$0xff]
        %v214 = vld [vmem:[%s178 + $0x38] sm:$0xff]
        %v215 = vld [vmem:[%s178 + $0x40] sm:$0xff]
        %v216 = vld [vmem:[%s178 + $0x48] sm:$0xff]
        %v217 = vld [vmem:[%s178 + $0x50] sm:$0xff]
        %v218 = vld [vmem:[%s178 + $0x58] sm:$0xff]
        %v219 = vld [vmem:[%s178 + $0x60] sm:$0xff]
        %v220 = vld [vmem:[%s178 + $0x68] sm:$0xff]
        %v221 = vld [vmem:[%s178 + $0x70] sm:$0xff]
        %v222 = vld [vmem:[%s178 + $0x78] sm:$0xff]
        %v223 = vld [vmem:[%s178 + $0x80] sm:$0xff]
        %v224 = vld [vmem:[%s178 + $0x88] sm:$0xff]
        %v225 = vld [vmem:[%s178 + $0x90] sm:$0xff]
        %v226 = vld [vmem:[%s178 + $0x98] sm:$0xff]
        %v227 = vld [vmem:[%s178 + $0xa0] sm:$0xff]
        %v228 = vld [vmem:[%s178 + $0xa8] sm:$0xff]
        %v229 = vld [vmem:[%s178 + $0xb0] sm:$0xff]
        %v230 = vld [vmem:[%s178 + $0xb8] sm:$0xff]
        %v231 = vld [vmem:[%s178 + $0xc0] sm:$0xff]
        %v232 = vld [vmem:[%s178 + $0xc8] sm:$0xff]
        %v233 = vld [vmem:[%s178 + $0xd0] sm:$0xff]
        %v234 = vld [vmem:[%s178 + $0xd8] sm:$0xff]
        %v235 = vld [vmem:[%s178 + $0xe0] sm:$0xff]
        %v236 = vld [vmem:[%s178 + $0xe8] sm:$0xff]
        %v237 = vld [vmem:[%s178 + $0xf0] sm:$0xff]
        %v238 = vld [vmem:[%s178 + $0xf8] sm:$0xff]
        %v239 = vld [vmem:[%s178 + $0x100] sm:$0xff]
        %v240 = vld [vmem:[#allocation5] sm:$0xff]
        %v241 = vld [vmem:[#allocation5 + $0x8] sm:$0xff]
        %v242 = vld [vmem:[#allocation5 + $0x10] sm:$0xff]
        %v243 = vld [vmem:[#allocation5 + $0x18] sm:$0xff]
        %v244 = vld [vmem:[#allocation5 + $0x20] sm:$0xff]
        %v245 = vld [vmem:[#allocation5 + $0x28] sm:$0xff]
        %v246 = vld [vmem:[#allocation5 + $0x30] sm:$0xff]
        %v247 = vld [vmem:[#allocation5 + $0x38] sm:$0xff]
        %v248 = vld [vmem:[#allocation5 + $0x40] sm:$0xff]
        %v249 = vld [vmem:[#allocation5 + $0x48] sm:$0xff]
        %v250 = vld [vmem:[#allocation5 + $0x50] sm:$0xff]
        %v251 = vld [vmem:[#allocation5 + $0x58] sm:$0xff]
        %v252 = vld [vmem:[#allocation5 + $0x60] sm:$0xff]
        %v253 = vld [vmem:[#allocation5 + $0x68] sm:$0xff]
        %v254 = vld [vmem:[#allocation5 + $0x70] sm:$0xff]
        %v255 = vld [vmem:[#allocation5 + $0x78] sm:$0xff]
        %v256 = vld [vmem:[#allocation5 + $0x80] sm:$0xff]
        %v257 = vld [vmem:[#allocation5 + $0x88] sm:$0xff]
        %v258 = vld [vmem:[#allocation5 + $0x90] sm:$0xff]
        %v259 = vld [vmem:[#allocation5 + $0x98] sm:$0xff]
        %v260 = vld [vmem:[#allocation5 + $0xa0] sm:$0xff]
        %v261 = vld [vmem:[#allocation5 + $0xa8] sm:$0xff]
        %v262 = vld [vmem:[#allocation5 + $0xb0] sm:$0xff]
        %v263 = vld [vmem:[#allocation5 + $0xb8] sm:$0xff]
        %v264 = vld [vmem:[#allocation5 + $0xc0] sm:$0xff]
        %v265 = vld [vmem:[#allocation5 + $0xc8] sm:$0xff]
        %v266 = vld [vmem:[#allocation5 + $0xd0] sm:$0xff]
        %v267 = vld [vmem:[#allocation5 + $0xd8] sm:$0xff]
        %v268 = vld [vmem:[#allocation5 + $0xe0] sm:$0xff]
        %v269 = vld [vmem:[#allocation5 + $0xe8] sm:$0xff]
        %v270 = vld [vmem:[#allocation5 + $0xf0] sm:$0xff]
        %v271 = vld [vmem:[#allocation5 + $0xf8] sm:$0xff]
        %v272 = vld [vmem:[#allocation5 + $0x100] sm:$0xff]
        %v273 = vld [vmem:[#allocation5 + $0x108] sm:$0xff]
        %v274 = vld [vmem:[#allocation5 + $0x110] sm:$0xff]
        %v275 = vld [vmem:[#allocation5 + $0x118] sm:$0xff]
        %v276 = vld [vmem:[#allocation5 + $0x120] sm:$0xff]
        %v277 = vld [vmem:[#allocation5 + $0x128] sm:$0xff]
        %v278 = vld [vmem:[#allocation5 + $0x130] sm:$0xff]
        %v279 = vld [vmem:[#allocation5 + $0x138] sm:$0xff]
        %v280 = vld [vmem:[#allocation5 + $0x140] sm:$0xff]
        %v281 = vld [vmem:[#allocation5 + $0x148] sm:$0xff]
        %v282 = vld [vmem:[#allocation5 + $0x150] sm:$0xff]
        %v283 = vld [vmem:[#allocation5 + $0x158] sm:$0xff]
        %v284 = vld [vmem:[#allocation5 + $0x160] sm:$0xff]
        %v285 = vld [vmem:[#allocation5 + $0x168] sm:$0xff]
        %v286 = vld [vmem:[#allocation5 + $0x170] sm:$0xff]
        %v287 = vld [vmem:[#allocation5 + $0x178] sm:$0xff]
        %v288 = vld [vmem:[#allocation5 + $0x180] sm:$0xff]
        %v289 = vld [vmem:[#allocation5 + $0x188] sm:$0xff]
        %v290 = vld [vmem:[#allocation5 + $0x190] sm:$0xff]
        %v291 = vld [vmem:[#allocation5 + $0x198] sm:$0xff]
        %v292 = vld [vmem:[#allocation5 + $0x1a0] sm:$0xff]
        %v293 = vld [vmem:[#allocation5 + $0x1a8] sm:$0xff]
        %v294 = vld [vmem:[#allocation5 + $0x1b0] sm:$0xff]
        %v295 = vld [vmem:[#allocation5 + $0x1b8] sm:$0xff]
        %v296 = vld [vmem:[#allocation5 + $0x1c0] sm:$0xff]
        %v297 = vld [vmem:[#allocation5 + $0x1c8] sm:$0xff]
        %v298 = vld [vmem:[#allocation5 + $0x1d0] sm:$0xff]
        %v299 = vld [vmem:[#allocation5 + $0x1d8] sm:$0xff]
        %v300 = vld [vmem:[#allocation5 + $0x1e0] sm:$0xff]
        %v301 = vld [vmem:[#allocation5 + $0x1e8] sm:$0xff]
        %v302 = vld [vmem:[#allocation5 + $0x1f0] sm:$0xff]
        %v303 = vld [vmem:[#allocation5 + $0x1f8] sm:$0xff]
        %v304 = vld [vmem:[#allocation5 + $0x200] sm:$0xff]
        %v305 = vld [vmem:[#allocation5 + $0x208] sm:$0xff]
        %v306 = vld [vmem:[#allocation5 + $0x210] sm:$0xff]
        %v307 = vld [vmem:[#allocation5 + $0x218] sm:$0xff]
        %v308 = vld [vmem:[#allocation5 + $0x220] sm:$0xff]
        %v309 = vld [vmem:[#allocation5 + $0x228] sm:$0xff]
        %v310 = vld [vmem:[#allocation5 + $0x230] sm:$0xff]
        %v311 = vld [vmem:[#allocation5 + $0x238] sm:$0xff]
        %v312 = vld [vmem:[#allocation5 + $0x240] sm:$0xff]
        %v313 = vld [vmem:[#allocation5 + $0x248] sm:$0xff]
        %v314 = vld [vmem:[#allocation5 + $0x250] sm:$0xff]
        %v315 = vld [vmem:[#allocation5 + $0x258] sm:$0xff]
        %v316 = vld [vmem:[#allocation5 + $0x260] sm:$0xff]
        %v317 = vld [vmem:[#allocation5 + $0x268] sm:$0xff]
        %v318 = vld [vmem:[#allocation5 + $0x270] sm:$0xff]
        %v319 = vld [vmem:[#allocation5 + $0x278] sm:$0xff]
        %v320 = vld [vmem:[#allocation5 + $0x280] sm:$0xff]
        %v321 = vld [vmem:[#allocation5 + $0x288] sm:$0xff]
        %v322 = vld [vmem:[#allocation5 + $0x290] sm:$0xff]
        %v323 = vld [vmem:[#allocation5 + $0x298] sm:$0xff]
        %v324 = vld [vmem:[#allocation5 + $0x2a0] sm:$0xff]
        %v325 = vld [vmem:[#allocation5 + $0x2a8] sm:$0xff]
        %v326 = vld [vmem:[#allocation5 + $0x2b0] sm:$0xff]
        %v327 = vld [vmem:[#allocation5 + $0x2b8] sm:$0xff]
        %v328 = vld [vmem:[#allocation5 + $0x2c0] sm:$0xff]
        %v329 = vld [vmem:[#allocation5 + $0x2c8] sm:$0xff]
        %v330 = vld [vmem:[#allocation5 + $0x2d0] sm:$0xff]
        %v331 = vld [vmem:[#allocation5 + $0x2d8] sm:$0xff]
        %v332 = vld [vmem:[#allocation5 + $0x2e0] sm:$0xff]
        %v333 = vld [vmem:[#allocation5 + $0x2e8] sm:$0xff]
        %v334 = vld [vmem:[#allocation5 + $0x2f0] sm:$0xff]
        %v335 = vld [vmem:[#allocation5 + $0x2f8] sm:$0xff]
        %v336 = vld [vmem:[#allocation5 + $0x300] sm:$0xff]
        %v337 = vld [vmem:[#allocation5 + $0x308] sm:$0xff]
        %v338 = vld [vmem:[#allocation5 + $0x310] sm:$0xff]
        %v339 = vld [vmem:[#allocation5 + $0x318] sm:$0xff]
        %v340 = vld [vmem:[#allocation5 + $0x320] sm:$0xff]
        %v341 = vld [vmem:[#allocation5 + $0x328] sm:$0xff]
        %v342 = vld [vmem:[#allocation5 + $0x330] sm:$0xff]
        %v343 = vld [vmem:[#allocation5 + $0x338] sm:$0xff]
        %v344 = vld [vmem:[#allocation5 + $0x340] sm:$0xff]
        %v345 = vld [vmem:[#allocation5 + $0x348] sm:$0xff]
        %v346 = vld [vmem:[#allocation5 + $0x350] sm:$0xff]
        %v347 = vld [vmem:[#allocation5 + $0x358] sm:$0xff]
        %v348 = vld [vmem:[#allocation5 + $0x360] sm:$0xff]
        %v349 = vld [vmem:[#allocation5 + $0x368] sm:$0xff]
        %v350 = vld [vmem:[#allocation5 + $0x370] sm:$0xff]
        %v351 = vld [vmem:[#allocation5 + $0x378] sm:$0xff]
        %v352 = vld [vmem:[#allocation5 + $0x380] sm:$0xff]
        %v353 = vld [vmem:[#allocation5 + $0x388] sm:$0xff]
        %v354 = vld [vmem:[#allocation5 + $0x390] sm:$0xff]
        %v355 = vld [vmem:[#allocation5 + $0x398] sm:$0xff]
        %v356 = vld [vmem:[#allocation5 + $0x3a0] sm:$0xff]
        %v357 = vld [vmem:[#allocation5 + $0x3a8] sm:$0xff]
        %v358 = vld [vmem:[#allocation5 + $0x3b0] sm:$0xff]
        %v359 = vld [vmem:[#allocation5 + $0x3b8] sm:$0xff]
        %v360 = vld [vmem:[#allocation5 + $0x3c0] sm:$0xff]
        %v361 = vld [vmem:[#allocation5 + $0x3c8] sm:$0xff]
        %v362 = vld [vmem:[#allocation5 + $0x3d0] sm:$0xff]
        %v363 = vld [vmem:[#allocation5 + $0x3d8] sm:$0xff]
        %v364 = vld [vmem:[#allocation5 + $0x3e0] sm:$0xff]
        %v365 = vld [vmem:[#allocation5 + $0x3e8] sm:$0xff]
        %v366 = vld [vmem:[#allocation5 + $0x3f0] sm:$0xff]
        %v367 = vld [vmem:[#allocation5 + $0x3f8] sm:$0xff]
        %v368 = vld [vmem:[#allocation5 + $0x400] sm:$0xff]
        %v369 = vld [vmem:[#allocation5 + $0x408] sm:$0xff]
        %v370 = vld [vmem:[#allocation5 + $0x410] sm:$0xff]
        %v371 = vld [vmem:[#allocation5 + $0x418] sm:$0xff]
        %v372 = vld [vmem:[#allocation5 + $0x420] sm:$0xff]
        %v373 = vld [vmem:[#allocation5 + $0x428] sm:$0xff]
        %v374 = vld [vmem:[#allocation5 + $0x430] sm:$0xff]
        %v375 = vld [vmem:[#allocation5 + $0x438] sm:$0xff]
        %v376 = vld [vmem:[#allocation5 + $0x440] sm:$0xff]
        %v377 = vld [vmem:[#allocation5 + $0x448] sm:$0xff]
        %v378 = vld [vmem:[#allocation5 + $0x450] sm:$0xff]
        %v379 = vld [vmem:[#allocation5 + $0x458] sm:$0xff]
        %v380 = vld [vmem:[#allocation5 + $0x460] sm:$0xff]
        %v381 = vld [vmem:[#allocation5 + $0x468] sm:$0xff]
        %v382 = vld [vmem:[#allocation5 + $0x470] sm:$0xff]
        %v383 = vld [vmem:[#allocation5 + $0x478] sm:$0xff]
        %v384 = vld [vmem:[#allocation5 + $0x480] sm:$0xff]
        %v385 = vld [vmem:[#allocation5 + $0x488] sm:$0xff]
        %v386 = vld [vmem:[#allocation5 + $0x490] sm:$0xff]
        %v387 = vld [vmem:[#allocation5 + $0x498] sm:$0xff]
        %v388 = vld [vmem:[#allocation5 + $0x4a0] sm:$0xff]
        %v389 = vld [vmem:[#allocation5 + $0x4a8] sm:$0xff]
        %v390 = vld [vmem:[#allocation5 + $0x4b0] sm:$0xff]
        %v391 = vld [vmem:[#allocation5 + $0x4b8] sm:$0xff]
        %v392 = vld [vmem:[#allocation5 + $0x4c0] sm:$0xff]
        %v393 = vld [vmem:[#allocation5 + $0x4c8] sm:$0xff]
        %v394 = vld [vmem:[#allocation5 + $0x4d0] sm:$0xff]
        %v395 = vld [vmem:[#allocation5 + $0x4d8] sm:$0xff]
        %v396 = vld [vmem:[#allocation5 + $0x4e0] sm:$0xff]
        %v397 = vld [vmem:[#allocation5 + $0x4e8] sm:$0xff]
        %v398 = vld [vmem:[#allocation5 + $0x4f0] sm:$0xff]
        %v399 = vld [vmem:[#allocation5 + $0x4f8] sm:$0xff]
        %v400 = vld [vmem:[#allocation5 + $0x500] sm:$0xff]
        %v401 = vld [vmem:[#allocation5 + $0x508] sm:$0xff]
        %v402 = vld [vmem:[#allocation5 + $0x510] sm:$0xff]
        %v403 = vld [vmem:[#allocation5 + $0x518] sm:$0xff]
        %v404 = vld [vmem:[#allocation5 + $0x520] sm:$0xff]
        %v405 = vld [vmem:[#allocation5 + $0x528] sm:$0xff]
        %v406 = vld [vmem:[#allocation5 + $0x530] sm:$0xff]
        %v407 = vld [vmem:[#allocation5 + $0x538] sm:$0xff]
        %v408 = vld [vmem:[%s2] sm:$0x1]
        %v410 = vlaneseq
        %v411 = vshrl.u32 %v410, 7
        %v412 = vsub.s32 0, %v411
        %v413 = vrot.slane %v408, %v412
        %vm415 = vcmask 523264
        %v417 = vsel %vm415, %v217, 0
        %v420 = vsel %vm415, %v228, 0
        %v423 = vsel %vm415, %v239, 0
        %425 = vmatprep.subr.mxu0 0.0
        %426 = vmatpush1.msra.mxu0 %v255
        %427 = vmatprep.subr.mxu0 0.0
        %428 = vmatpush1.msra.mxu0 %v254
        %429 = vmatprep.subr.mxu0 0.0
        %430 = vmatpush1.msra.mxu0 %v253
        %431 = vmatprep.subr.mxu0 0.0
        %432 = vmatpush1.msra.mxu0 %v252
        %433 = vmatprep.subr.mxu0 0.0
        %434 = vmatpush1.msra.mxu0 %v251
        %435 = vmatprep.subr.mxu0 0.0
        %436 = vmatpush1.msra.mxu0 %v250
        %437 = vmatprep.subr.mxu0 0.0
        %438 = vmatpush1.msra.mxu0 %v249
        %439 = vmatprep.subr.mxu0 0.0
        %440 = vmatpush1.msra.mxu0 %v248
        %441 = vmatprep.subr.mxu0 0.0
        %442 = vmatpush1.msra.mxu0 %v247
        %443 = vmatprep.subr.mxu0 0.0
        %444 = vmatpush1.msra.mxu0 %v246
        %445 = vmatprep.subr.mxu0 0.0
        %446 = vmatpush1.msra.mxu0 %v245
        %447 = vmatprep.subr.mxu0 0.0
        %448 = vmatpush1.msra.mxu0 %v244
        %449 = vmatprep.subr.mxu0 0.0
        %450 = vmatpush1.msra.mxu0 %v243
        %451 = vmatprep.subr.mxu0 0.0
        %452 = vmatpush1.msra.mxu0 %v242
        %453 = vmatprep.subr.mxu0 0.0
        %454 = vmatpush1.msra.mxu0 %v241
        %455 = vmatprep.subr.mxu0 0.0
        %456 = vmatpush1.msra.mxu0 %v240
        %457 = vmatprep.subr.mxu0 0.0
        %458 = vmatpush2.msra.mxu0 %v271
        %459 = vmatprep.subr.mxu0 0.0
        %460 = vmatpush2.msra.mxu0 %v270
        %461 = vmatprep.subr.mxu0 0.0
        %462 = vmatpush2.msra.mxu0 %v269
        %463 = vmatprep.subr.mxu0 0.0
        %464 = vmatpush2.msra.mxu0 %v268
        %465 = vmatprep.subr.mxu0 0.0
        %466 = vmatpush2.msra.mxu0 %v267
        %467 = vmatprep.subr.mxu0 0.0
        %468 = vmatpush2.msra.mxu0 %v266
        %469 = vmatprep.subr.mxu0 0.0
        %470 = vmatpush2.msra.mxu0 %v265
        %471 = vmatprep.subr.mxu0 0.0
        %472 = vmatpush2.msra.mxu0 %v264
        %473 = vmatprep.subr.mxu0 0.0
        %474 = vmatpush2.msra.mxu0 %v263
        %475 = vmatprep.subr.mxu0 0.0
        %476 = vmatpush2.msra.mxu0 %v262
        %477 = vmatprep.subr.mxu0 0.0
        %478 = vmatpush2.msra.mxu0 %v261
        %479 = vmatprep.subr.mxu0 0.0
        %480 = vmatpush2.msra.mxu0 %v260
        %481 = vmatprep.subr.mxu0 0.0
        %482 = vmatpush2.msra.mxu0 %v259
        %483 = vmatprep.subr.mxu0 0.0
        %484 = vmatpush2.msra.mxu0 %v258
        %485 = vmatprep.subr.mxu0 0.0
        %486 = vmatpush2.msra.mxu0 %v257
        %487 = vmatprep.subr.mxu0 0.0
        %488 = vmatpush2.msra.mxu0 %v256
        %489 = vmatprep.mubr.f32.mxu0 %v208
        %490 = vmatmul.mubr.f32.gmra.mxu0 %v207
        %v491 = vpop.f32.mrf.mxu0
        %v492 = vadd.f32 %v413, %v491
        %v493 = vpop.f32.mrf.mxu0
        %494 = vmatprep.mubr.f32.mxu0 %v219
        %495 = vmatmul.mubr.f32.gmra.mxu0 %v218
        %v496 = vpop.f32.mrf.mxu0
        %v497 = vadd.f32 %v413, %v496
        %v498 = vpop.f32.mrf.mxu0
        %499 = vmatprep.mubr.f32.mxu0 %v230
        %500 = vmatmul.mubr.f32.gmra.mxu0 %v229
        %v501 = vpop.f32.mrf.mxu0
        %v502 = vadd.f32 %v413, %v501
        %v503 = vpop.f32.mrf.mxu0
        %504 = vdwg.mxu0
        %505 = vmatprep.subr.mxu0 0.0
        %506 = vmatpush1.msra.mxu0 %v287
        %507 = vmatprep.subr.mxu0 0.0
        %508 = vmatpush1.msra.mxu0 %v286
        %509 = vmatprep.subr.mxu0 0.0
        %510 = vmatpush1.msra.mxu0 %v285
        %511 = vmatprep.subr.mxu0 0.0
        %512 = vmatpush1.msra.mxu0 %v284
        %513 = vmatprep.subr.mxu0 0.0
        %514 = vmatpush1.msra.mxu0 %v283
        %515 = vmatprep.subr.mxu0 0.0
        %516 = vmatpush1.msra.mxu0 %v282
        %517 = vmatprep.subr.mxu0 0.0
        %518 = vmatpush1.msra.mxu0 %v281
        %519 = vmatprep.subr.mxu0 0.0
        %520 = vmatpush1.msra.mxu0 %v280
        %521 = vmatprep.subr.mxu0 0.0
        %522 = vmatpush1.msra.mxu0 %v279
        %523 = vmatprep.subr.mxu0 0.0
        %524 = vmatpush1.msra.mxu0 %v278
        %525 = vmatprep.subr.mxu0 0.0
        %526 = vmatpush1.msra.mxu0 %v277
        %527 = vmatprep.subr.mxu0 0.0
        %528 = vmatpush1.msra.mxu0 %v276
        %529 = vmatprep.subr.mxu0 0.0
        %530 = vmatpush1.msra.mxu0 %v275
        %531 = vmatprep.subr.mxu0 0.0
        %532 = vmatpush1.msra.mxu0 %v274
        %533 = vmatprep.subr.mxu0 0.0
        %534 = vmatpush1.msra.mxu0 %v273
        %535 = vmatprep.subr.mxu0 0.0
        %536 = vmatpush1.msra.mxu0 %v272
        %537 = vmatprep.subr.mxu0 0.0
        %538 = vmatpush2.msra.mxu0 %v303
        %539 = vmatprep.subr.mxu0 0.0
        %540 = vmatpush2.msra.mxu0 %v302
        %541 = vmatprep.subr.mxu0 0.0
        %542 = vmatpush2.msra.mxu0 %v301
        %543 = vmatprep.subr.mxu0 0.0
        %544 = vmatpush2.msra.mxu0 %v300
        %545 = vmatprep.subr.mxu0 0.0
        %546 = vmatpush2.msra.mxu0 %v299
        %547 = vmatprep.subr.mxu0 0.0
        %548 = vmatpush2.msra.mxu0 %v298
        %549 = vmatprep.subr.mxu0 0.0
        %550 = vmatpush2.msra.mxu0 %v297
        %551 = vmatprep.subr.mxu0 0.0
        %552 = vmatpush2.msra.mxu0 %v296
        %553 = vmatprep.subr.mxu0 0.0
        %554 = vmatpush2.msra.mxu0 %v295
        %555 = vmatprep.subr.mxu0 0.0
        %556 = vmatpush2.msra.mxu0 %v294
        %557 = vmatprep.subr.mxu0 0.0
        %558 = vmatpush2.msra.mxu0 %v293
        %559 = vmatprep.subr.mxu0 0.0
        %560 = vmatpush2.msra.mxu0 %v292
        %561 = vmatprep.subr.mxu0 0.0
        %562 = vmatpush2.msra.mxu0 %v291
        %563 = vmatprep.subr.mxu0 0.0
        %564 = vmatpush2.msra.mxu0 %v290
        %565 = vmatprep.subr.mxu0 0.0
        %566 = vmatpush2.msra.mxu0 %v289
        %567 = vmatprep.subr.mxu0 0.0
        %568 = vmatpush2.msra.mxu0 %v288
        %569 = vmatprep.mubr.f32.mxu0 %v210
        %570 = vmatmul.mubr.f32.gmra.mxu0 %v209
        %v571 = vpop.f32.mrf.mxu0
        %v572 = vadd.f32 %v492, %v571
        %v573 = vpop.f32.mrf.mxu0
        %574 = vmatprep.mubr.f32.mxu0 %v221
        %575 = vmatmul.mubr.f32.gmra.mxu0 %v220
        %v576 = vpop.f32.mrf.mxu0
        %v577 = vadd.f32 %v497, %v576
        %v578 = vpop.f32.mrf.mxu0
        %579 = vmatprep.mubr.f32.mxu0 %v232
        %580 = vmatmul.mubr.f32.gmra.mxu0 %v231
        %v581 = vpop.f32.mrf.mxu0
        %v582 = vadd.f32 %v502, %v581
        %v583 = vpop.f32.mrf.mxu0
        %584 = vdwg.mxu0
        %585 = vmatprep.subr.mxu0 0.0
        %586 = vmatpush1.msra.mxu0 %v319
        %587 = vmatprep.subr.mxu0 0.0
        %588 = vmatpush1.msra.mxu0 %v318
        %589 = vmatprep.subr.mxu0 0.0
        %590 = vmatpush1.msra.mxu0 %v317
        %591 = vmatprep.subr.mxu0 0.0
        %592 = vmatpush1.msra.mxu0 %v316
        %593 = vmatprep.subr.mxu0 0.0
        %594 = vmatpush1.msra.mxu0 %v315
        %595 = vmatprep.subr.mxu0 0.0
        %596 = vmatpush1.msra.mxu0 %v314
        %597 = vmatprep.subr.mxu0 0.0
        %598 = vmatpush1.msra.mxu0 %v313
        %599 = vmatprep.subr.mxu0 0.0
        %600 = vmatpush1.msra.mxu0 %v312
        %601 = vmatprep.subr.mxu0 0.0
        %602 = vmatpush1.msra.mxu0 %v311
        %603 = vmatprep.subr.mxu0 0.0
        %604 = vmatpush1.msra.mxu0 %v310
        %605 = vmatprep.subr.mxu0 0.0
        %606 = vmatpush1.msra.mxu0 %v309
        %607 = vmatprep.subr.mxu0 0.0
        %608 = vmatpush1.msra.mxu0 %v308
        %609 = vmatprep.subr.mxu0 0.0
        %610 = vmatpush1.msra.mxu0 %v307
        %611 = vmatprep.subr.mxu0 0.0
        %612 = vmatpush1.msra.mxu0 %v306
        %613 = vmatprep.subr.mxu0 0.0
        %614 = vmatpush1.msra.mxu0 %v305
        %615 = vmatprep.subr.mxu0 0.0
        %616 = vmatpush1.msra.mxu0 %v304
        %617 = vmatprep.subr.mxu0 0.0
        %618 = vmatpush2.msra.mxu0 %v335
        %619 = vmatprep.subr.mxu0 0.0
        %620 = vmatpush2.msra.mxu0 %v334
        %621 = vmatprep.subr.mxu0 0.0
        %622 = vmatpush2.msra.mxu0 %v333
        %623 = vmatprep.subr.mxu0 0.0
        %624 = vmatpush2.msra.mxu0 %v332
        %625 = vmatprep.subr.mxu0 0.0
        %626 = vmatpush2.msra.mxu0 %v331
        %627 = vmatprep.subr.mxu0 0.0
        %628 = vmatpush2.msra.mxu0 %v330
        %629 = vmatprep.subr.mxu0 0.0
        %630 = vmatpush2.msra.mxu0 %v329
        %631 = vmatprep.subr.mxu0 0.0
        %632 = vmatpush2.msra.mxu0 %v328
        %633 = vmatprep.subr.mxu0 0.0
        %634 = vmatpush2.msra.mxu0 %v327
        %635 = vmatprep.subr.mxu0 0.0
        %636 = vmatpush2.msra.mxu0 %v326
        %637 = vmatprep.subr.mxu0 0.0
        %638 = vmatpush2.msra.mxu0 %v325
        %639 = vmatprep.subr.mxu0 0.0
        %640 = vmatpush2.msra.mxu0 %v324
        %641 = vmatprep.subr.mxu0 0.0
        %642 = vmatpush2.msra.mxu0 %v323
        %643 = vmatprep.subr.mxu0 0.0
        %644 = vmatpush2.msra.mxu0 %v322
        %645 = vmatprep.subr.mxu0 0.0
        %646 = vmatpush2.msra.mxu0 %v321
        %647 = vmatprep.subr.mxu0 0.0
        %648 = vmatpush2.msra.mxu0 %v320
        %649 = vmatprep.mubr.f32.mxu0 %v212
        %650 = vmatmul.mubr.f32.gmra.mxu0 %v211
        %v651 = vpop.f32.mrf.mxu0
        %v652 = vadd.f32 %v572, %v651
        %v653 = vpop.f32.mrf.mxu0
        %654 = vmatprep.mubr.f32.mxu0 %v223
        %655 = vmatmul.mubr.f32.gmra.mxu0 %v222
        %v656 = vpop.f32.mrf.mxu0
        %v657 = vadd.f32 %v577, %v656
        %v658 = vpop.f32.mrf.mxu0
        %659 = vmatprep.mubr.f32.mxu0 %v234
        %660 = vmatmul.mubr.f32.gmra.mxu0 %v233
        %v661 = vpop.f32.mrf.mxu0
        %v662 = vadd.f32 %v582, %v661
        %v663 = vpop.f32.mrf.mxu0
        %664 = vdwg.mxu0
        %665 = vmatprep.subr.mxu0 0.0
        %666 = vmatpush1.msra.mxu0 %v351
        %667 = vmatprep.subr.mxu0 0.0
        %668 = vmatpush1.msra.mxu0 %v350
        %669 = vmatprep.subr.mxu0 0.0
        %670 = vmatpush1.msra.mxu0 %v349
        %671 = vmatprep.subr.mxu0 0.0
        %672 = vmatpush1.msra.mxu0 %v348
        %673 = vmatprep.subr.mxu0 0.0
        %674 = vmatpush1.msra.mxu0 %v347
        %675 = vmatprep.subr.mxu0 0.0
        %676 = vmatpush1.msra.mxu0 %v346
        %677 = vmatprep.subr.mxu0 0.0
        %678 = vmatpush1.msra.mxu0 %v345
        %679 = vmatprep.subr.mxu0 0.0
        %680 = vmatpush1.msra.mxu0 %v344
        %681 = vmatprep.subr.mxu0 0.0
        %682 = vmatpush1.msra.mxu0 %v343
        %683 = vmatprep.subr.mxu0 0.0
        %684 = vmatpush1.msra.mxu0 %v342
        %685 = vmatprep.subr.mxu0 0.0
        %686 = vmatpush1.msra.mxu0 %v341
        %687 = vmatprep.subr.mxu0 0.0
        %688 = vmatpush1.msra.mxu0 %v340
        %689 = vmatprep.subr.mxu0 0.0
        %690 = vmatpush1.msra.mxu0 %v339
        %691 = vmatprep.subr.mxu0 0.0
        %692 = vmatpush1.msra.mxu0 %v338
        %693 = vmatprep.subr.mxu0 0.0
        %694 = vmatpush1.msra.mxu0 %v337
        %695 = vmatprep.subr.mxu0 0.0
        %696 = vmatpush1.msra.mxu0 %v336
        %697 = vmatprep.subr.mxu0 0.0
        %698 = vmatpush2.msra.mxu0 %v367
        %699 = vmatprep.subr.mxu0 0.0
        %700 = vmatpush2.msra.mxu0 %v366
        %701 = vmatprep.subr.mxu0 0.0
        %702 = vmatpush2.msra.mxu0 %v365
        %703 = vmatprep.subr.mxu0 0.0
        %704 = vmatpush2.msra.mxu0 %v364
        %705 = vmatprep.subr.mxu0 0.0
        %706 = vmatpush2.msra.mxu0 %v363
        %707 = vmatprep.subr.mxu0 0.0
        %708 = vmatpush2.msra.mxu0 %v362
        %709 = vmatprep.subr.mxu0 0.0
        %710 = vmatpush2.msra.mxu0 %v361
        %711 = vmatprep.subr.mxu0 0.0
        %712 = vmatpush2.msra.mxu0 %v360
        %713 = vmatprep.subr.mxu0 0.0
        %714 = vmatpush2.msra.mxu0 %v359
        %715 = vmatprep.subr.mxu0 0.0
        %716 = vmatpush2.msra.mxu0 %v358
        %717 = vmatprep.subr.mxu0 0.0
        %718 = vmatpush2.msra.mxu0 %v357
        %719 = vmatprep.subr.mxu0 0.0
        %720 = vmatpush2.msra.mxu0 %v356
        %721 = vmatprep.subr.mxu0 0.0
        %722 = vmatpush2.msra.mxu0 %v355
        %723 = vmatprep.subr.mxu0 0.0
        %724 = vmatpush2.msra.mxu0 %v354
        %725 = vmatprep.subr.mxu0 0.0
        %726 = vmatpush2.msra.mxu0 %v353
        %727 = vmatprep.subr.mxu0 0.0
        %728 = vmatpush2.msra.mxu0 %v352
        %729 = vmatprep.mubr.f32.mxu0 %v214
        %730 = vmatmul.mubr.f32.gmra.mxu0 %v213
        %v731 = vpop.f32.mrf.mxu0
        %v732 = vadd.f32 %v652, %v731
        %v733 = vpop.f32.mrf.mxu0
        %734 = vmatprep.mubr.f32.mxu0 %v225
        %735 = vmatmul.mubr.f32.gmra.mxu0 %v224
        %v736 = vpop.f32.mrf.mxu0
        %v737 = vadd.f32 %v657, %v736
        %v738 = vpop.f32.mrf.mxu0
        %739 = vmatprep.mubr.f32.mxu0 %v236
        %740 = vmatmul.mubr.f32.gmra.mxu0 %v235
        %v741 = vpop.f32.mrf.mxu0
        %v742 = vadd.f32 %v662, %v741
        %v743 = vpop.f32.mrf.mxu0
        %744 = vdwg.mxu0
        %745 = vmatprep.subr.mxu0 0.0
        %746 = vmatpush1.msra.mxu0 %v383
        %747 = vmatprep.subr.mxu0 0.0
        %748 = vmatpush1.msra.mxu0 %v382
        %749 = vmatprep.subr.mxu0 0.0
        %750 = vmatpush1.msra.mxu0 %v381
        %751 = vmatprep.subr.mxu0 0.0
        %752 = vmatpush1.msra.mxu0 %v380
        %753 = vmatprep.subr.mxu0 0.0
        %754 = vmatpush1.msra.mxu0 %v379
        %755 = vmatprep.subr.mxu0 0.0
        %756 = vmatpush1.msra.mxu0 %v378
        %757 = vmatprep.subr.mxu0 0.0
        %758 = vmatpush1.msra.mxu0 %v377
        %759 = vmatprep.subr.mxu0 0.0
        %760 = vmatpush1.msra.mxu0 %v376
        %761 = vmatprep.subr.mxu0 0.0
        %762 = vmatpush1.msra.mxu0 %v375
        %763 = vmatprep.subr.mxu0 0.0
        %764 = vmatpush1.msra.mxu0 %v374
        %765 = vmatprep.subr.mxu0 0.0
        %766 = vmatpush1.msra.mxu0 %v373
        %767 = vmatprep.subr.mxu0 0.0
        %768 = vmatpush1.msra.mxu0 %v372
        %769 = vmatprep.subr.mxu0 0.0
        %770 = vmatpush1.msra.mxu0 %v371
        %771 = vmatprep.subr.mxu0 0.0
        %772 = vmatpush1.msra.mxu0 %v370
        %773 = vmatprep.subr.mxu0 0.0
        %774 = vmatpush1.msra.mxu0 %v369
        %775 = vmatprep.subr.mxu0 0.0
        %776 = vmatpush1.msra.mxu0 %v368
        %777 = vmatprep.subr.mxu0 0.0
        %778 = vmatpush2.msra.mxu0 %v399
        %779 = vmatprep.subr.mxu0 0.0
        %780 = vmatpush2.msra.mxu0 %v398
        %781 = vmatprep.subr.mxu0 0.0
        %782 = vmatpush2.msra.mxu0 %v397
        %783 = vmatprep.subr.mxu0 0.0
        %784 = vmatpush2.msra.mxu0 %v396
        %785 = vmatprep.subr.mxu0 0.0
        %786 = vmatpush2.msra.mxu0 %v395
        %787 = vmatprep.subr.mxu0 0.0
        %788 = vmatpush2.msra.mxu0 %v394
        %789 = vmatprep.subr.mxu0 0.0
        %790 = vmatpush2.msra.mxu0 %v393
        %791 = vmatprep.subr.mxu0 0.0
        %792 = vmatpush2.msra.mxu0 %v392
        %793 = vmatprep.subr.mxu0 0.0
        %794 = vmatpush2.msra.mxu0 %v391
        %795 = vmatprep.subr.mxu0 0.0
        %796 = vmatpush2.msra.mxu0 %v390
        %797 = vmatprep.subr.mxu0 0.0
        %798 = vmatpush2.msra.mxu0 %v389
        %799 = vmatprep.subr.mxu0 0.0
        %800 = vmatpush2.msra.mxu0 %v388
        %801 = vmatprep.subr.mxu0 0.0
        %802 = vmatpush2.msra.mxu0 %v387
        %803 = vmatprep.subr.mxu0 0.0
        %804 = vmatpush2.msra.mxu0 %v386
        %805 = vmatprep.subr.mxu0 0.0
        %806 = vmatpush2.msra.mxu0 %v385
        %807 = vmatprep.subr.mxu0 0.0
        %808 = vmatpush2.msra.mxu0 %v384
        %809 = vmatprep.mubr.f32.mxu0 %v216
        %810 = vmatmul.mubr.f32.gmra.mxu0 %v215
        %v811 = vpop.f32.mrf.mxu0
        %v812 = vadd.f32 %v732, %v811
        %v813 = vpop.f32.mrf.mxu0
        %814 = vmatprep.mubr.f32.mxu0 %v227
        %815 = vmatmul.mubr.f32.gmra.mxu0 %v226
        %v816 = vpop.f32.mrf.mxu0
        %v817 = vadd.f32 %v737, %v816
        %v818 = vpop.f32.mrf.mxu0
        %819 = vmatprep.mubr.f32.mxu0 %v238
        %820 = vmatmul.mubr.f32.gmra.mxu0 %v237
        %v821 = vpop.f32.mrf.mxu0
        %v822 = vadd.f32 %v742, %v821
        %v823 = vpop.f32.mrf.mxu0
        %824 = vdwg.mxu0
        %825 = vmatprep.subr.mxu0 0.0
        %826 = vmatpush1.msra.mxu0 0.0
        %827 = vmatprep.subr.mxu0 0.0
        %828 = vmatpush1.msra.mxu0 0.0
        %829 = vmatprep.subr.mxu0 0.0
        %830 = vmatpush1.msra.mxu0 0.0
        %831 = vmatprep.subr.mxu0 0.0
        %832 = vmatpush1.msra.mxu0 0.0
        %833 = vmatprep.subr.mxu0 0.0
        %834 = vmatpush1.msra.mxu0 0.0
        %835 = vmatprep.subr.mxu0 0.0
        %836 = vmatpush1.msra.mxu0 0.0
        %837 = vmatprep.subr.mxu0 0.0
        %838 = vmatpush1.msra.mxu0 0.0
        %839 = vmatprep.subr.mxu0 0.0
        %840 = vmatpush1.msra.mxu0 0.0
        %841 = vmatprep.subr.mxu0 0.0
        %842 = vmatpush1.msra.mxu0 %v407
        %843 = vmatprep.subr.mxu0 0.0
        %844 = vmatpush1.msra.mxu0 %v406
        %845 = vmatprep.subr.mxu0 0.0
        %846 = vmatpush1.msra.mxu0 %v405
        %847 = vmatprep.subr.mxu0 0.0
        %848 = vmatpush1.msra.mxu0 %v404
        %849 = vmatprep.subr.mxu0 0.0
        %850 = vmatpush1.msra.mxu0 %v403
        %851 = vmatprep.subr.mxu0 0.0
        %852 = vmatpush1.msra.mxu0 %v402
        %853 = vmatprep.subr.mxu0 0.0
        %854 = vmatpush1.msra.mxu0 %v401
        %855 = vmatprep.subr.mxu0 0.0
        %856 = vmatpush1.msra.mxu0 %v400
        %857 = vmatprep.subr.mxu0 0.0
        %858 = vmatpush2.msra.mxu0 0.0
        %859 = vmatprep.subr.mxu0 0.0
        %860 = vmatpush2.msra.mxu0 0.0
        %861 = vmatprep.subr.mxu0 0.0
        %862 = vmatpush2.msra.mxu0 0.0
        %863 = vmatprep.subr.mxu0 0.0
        %864 = vmatpush2.msra.mxu0 0.0
        %865 = vmatprep.subr.mxu0 0.0
        %866 = vmatpush2.msra.mxu0 0.0
        %867 = vmatprep.subr.mxu0 0.0
        %868 = vmatpush2.msra.mxu0 0.0
        %869 = vmatprep.subr.mxu0 0.0
        %870 = vmatpush2.msra.mxu0 0.0
        %871 = vmatprep.subr.mxu0 0.0
        %872 = vmatpush2.msra.mxu0 0.0
        %873 = vmatprep.subr.mxu0 0.0
        %874 = vmatpush2.msra.mxu0 0.0
        %875 = vmatprep.subr.mxu0 0.0
        %876 = vmatpush2.msra.mxu0 0.0
        %877 = vmatprep.subr.mxu0 0.0
        %878 = vmatpush2.msra.mxu0 0.0
        %879 = vmatprep.subr.mxu0 0.0
        %880 = vmatpush2.msra.mxu0 0.0
        %881 = vmatprep.subr.mxu0 0.0
        %882 = vmatpush2.msra.mxu0 0.0
        %883 = vmatprep.subr.mxu0 0.0
        %884 = vmatpush2.msra.mxu0 0.0
        %885 = vmatprep.subr.mxu0 0.0
        %886 = vmatpush2.msra.mxu0 0.0
        %887 = vmatprep.subr.mxu0 0.0
        %888 = vmatpush2.msra.mxu0 0.0
        %889 = vmatprep.mubr.f32.mxu0 0.0
        %890 = vmatmul.mubr.f32.gmra.mxu0 %v417
        %v891 = vpop.f32.mrf.mxu0
        %v892 = vadd.f32 %v812, %v891
        %v893 = vpop.f32.mrf.mxu0
        %894 = vmatprep.mubr.f32.mxu0 0.0
        %895 = vmatmul.mubr.f32.gmra.mxu0 %v420
        %v896 = vpop.f32.mrf.mxu0
        %v897 = vadd.f32 %v817, %v896
        %v898 = vpop.f32.mrf.mxu0
        %899 = vmatprep.mubr.f32.mxu0 0.0
        %900 = vmatmul.mubr.f32.gmra.mxu0 %v423
        %v901 = vpop.f32.mrf.mxu0
        %v902 = vadd.f32 %v822, %v901
        %v903 = vpop.f32.mrf.mxu0
        %904 = vdwg.mxu0
        %905 = vst [vmem:[%s204] sm:$0xff] %v892
        %906 = vst [vmem:[%s204 + $0x8] sm:$0xff] %v897
        %907 = vst [vmem:[%s204 + $0x10] sm:$0xff] %v902
        %s908 = sand.u32 %s97, 1
        %s909 = scalar_lea.sflag [#allocation4], %s908
        %s910 = sand.u32 %s97, 1
        %s911 = smul.addr %s910, 24
        %s912 = scalar_lea.vmem [#allocation7], %s911
        // Predicated region
        $region41: #{tpu_custom_call.1} parent=31 // pred_check
          %p913 = pneg %p107
        $region42: #{tpu_custom_call.1} parent=31 // pred_check_branch
          %915 = sbr.rel (%p913) target = $region44
        $region43: #{tpu_custom_call.1} parent=31 // pred_region
          %s916 = smul.u32 3, %s21
          %s918 = ssub.s32 384, 384
          %919 = vsyncadd %s909, %s918
          %s920 = smul.addr %s916, 128
          %s921 = scalar_lea.hbm %s3, %s920
          %s922 = sshll.u32 %s912, 4
          %s923 = int_to_ptr.vmem [resolvable:$true] %s922
          %928 = dma.vmem_to_hbm [thread:$0]  %s923, 384, %s921, %s909, 128, 128, 8
        $region44: #{tpu_custom_call.1} parent=31 // pred_fallthru
          _
      $region32: #{tpu_custom_call.1} parent=5 // pred_fallthru
        _
      %p929 = scmp.le.s32.totalorder 2, %s16
      // Predicated region
      $region45: #{tpu_custom_call.1} parent=5 // pred_check
        %p930 = pneg %p929
      $region46: #{tpu_custom_call.1} parent=5 // pred_check_branch
        %932 = sbr.rel (%p930) target = $region48
      $region47: #{tpu_custom_call.1} parent=5 // pred_region
        %s933 = ssub.s32 %s16, 2
        // Predicated region
        $region49: #{tpu_custom_call.1} parent=47 // pred_check
          %p934 = pneg %p113
        $region50: #{tpu_custom_call.1} parent=47 // pred_check_branch
          %936 = sbr.rel (%p934) target = $region52
        $region51: #{tpu_custom_call.1} parent=47 // pred_region
          %s937 = sand.u32 %s98, 1
          %s938 = scalar_lea.sflag [#allocation4], %s937
          %s939 = sand.u32 %s98, 1
          %s940 = smul.addr %s939, 24
          %s941 = scalar_lea.vmem [#allocation7], %s940
          %942 = dma.done %s938, 384
        $region52: #{tpu_custom_call.1} parent=47 // pred_fallthru
          _
      $region48: #{tpu_custom_call.1} parent=5 // pred_fallthru
        _
    $region6: #{tpu_custom_call.1} parent=1 // loop_footer
      %s20 = sadd.s32 1, %s16
    $region7: #{tpu_custom_call.1} parent=1 // loop_footer_branch
      %15 = sbr.rel target = $region3
    $region8: #{tpu_custom_call.1} parent=1 // loop_exit
      _
    %943 = vsyncpa [#allocation3], 1
    %s944 = scalar_lea.sflag [#allocation3], 1
    %945 = vsyncpa %s944, 1
    %946 = vsyncpa [#allocation6], 1
    %947 = vsyncpa [#allocation4], 1
    %s948 = scalar_lea.sflag [#allocation4], 1
    %949 = vsyncpa %s948, 1

</llo_original>
